<compile_context>
chip_gen: v5e
topology: v5e:2x2
jax: 0.10.0
libtpu: 0.0.40
codegen_flags: <defaults>
</compile_context>

<pallas_src>
import functools

import jax
import jax.numpy as jnp
from jax.experimental import pallas as pl
from jax.experimental.pallas import tpu as pltpu


def _dnn_kernel(*refs, num_layers, compute_dtype):
    """refs = (x_ref, w_0, b_0, ..., w_{L-1}, b_{L-1}, o_ref).

    x_ref:  (TB, D_in) row tile of the batch.
    w_i:    (D_i, D_{i+1}) resident projection weight.
    b_i:    (1, D_{i+1})  resident bias row.
    o_ref:  (TB, D_L) row tile of the output.
    """
    x_ref = refs[0]
    o_ref = refs[-1]

    h = x_ref[...].astype(compute_dtype)
    for i in range(num_layers):
        w = refs[1 + 2 * i][...].astype(compute_dtype)
        b = refs[2 + 2 * i][...].astype(jnp.float32)
        # MXU matmul with f32 accumulation; bias add / relu on the VPU.
        h = jnp.dot(h, w, preferred_element_type=jnp.float32) + b
        if i < num_layers - 1:
            h = jnp.maximum(h, 0.0)          # ReLU on all but the last layer
            h = h.astype(compute_dtype)      # no-op for f32 compute
    o_ref[...] = h.astype(o_ref.dtype)


def dnn_v2_forward(x, weights, biases, *, block_rows=128, use_bf16=False):
    """Fused MLP forward.

    x:       (B, D_in) float array.
    weights: list of (D_i, D_{i+1}) arrays (nn.Linear weights pre-transposed).
    biases:  list of (D_{i+1},) arrays.
    """
    B, d_in = x.shape
    num_layers = len(weights)
    assert num_layers >= 1 and len(biases) == num_layers
    d_out = weights[-1].shape[1]

    # Row tile: multiple of 8 sublanes, large enough to fill the MXU M dim,
    # and chosen so there are >= 2 grid steps when possible (v7x megacore).
    tb = max(8, min(block_rows, ((B + 7) // 8) * 8))
    b_pad = ((B + tb - 1) // tb) * tb
    if b_pad != B:
        x = jnp.pad(x, ((0, b_pad - B), (0, 0)))

    compute_dtype = jnp.bfloat16 if use_bf16 else jnp.float32
    biases_2d = [jnp.reshape(b, (1, -1)) for b in biases]

    kernel = functools.partial(
        _dnn_kernel, num_layers=num_layers, compute_dtype=compute_dtype)

    # Inputs/outputs stream by row tile; weights & biases are resident
    # (constant index_map -> same block every grid step).
    in_specs = [pl.BlockSpec((tb, d_in), lambda i: (i, 0))]
    flat_params = []
    for w, b in zip(weights, biases_2d):
        in_specs.append(pl.BlockSpec(w.shape, lambda i: (0, 0)))
        in_specs.append(pl.BlockSpec(b.shape, lambda i: (0, 0)))
        flat_params += [w, b]

    out = pl.pallas_call(
        kernel,
        out_shape=jax.ShapeDtypeStruct((b_pad, d_out), x.dtype),
        grid=(b_pad // tb,),
        in_specs=in_specs,
        out_specs=pl.BlockSpec((tb, d_out), lambda i: (i, 0)),
        compiler_params=pltpu.CompilerParams(
            dimension_semantics=("parallel",),
            vmem_limit_bytes=32 * 1024 * 1024,
        ),
    )(x, *flat_params)

    return out[:B] if b_pad != B else out


def _reference(x, weights, biases):
    """Pure-JAX reference mirroring DNN_v2.forward at inference."""
    h = x
    num_layers = len(weights)
    for i in range(num_layers):
        h = jnp.dot(h, weights[i], precision=jax.lax.Precision.HIGHEST) + biases[i]
        if i < num_layers - 1:
            h = jnp.maximum(h, 0.0)
    return h


if __name__ == "__main__":
    B = 256                      # batch (2 grid steps of 128 rows)
    inputs_dim = 32
    hidden_units = (128, 128)    # lane-dense (multiple of 128) hidden widths
    init_std = 0.05              # reference uses normal_(mean=0, std=init_std)

    key = jax.random.PRNGKey(0)
    keys = jax.random.split(key, 1 + 2 * len(hidden_units))

    x = jax.random.normal(keys[0], (B, inputs_dim), dtype=jnp.float32)

    dims = [inputs_dim] + list(hidden_units)
    weights, biases = [], []
    for i in range(len(hidden_units)):
        kw, kb = keys[1 + 2 * i], keys[2 + 2 * i]
        # nn.Linear stores W as (out, in); we pass it pre-transposed (in, out)
        # so y = x @ W + b matches x @ W_torch.T + b exactly.
        weights.append(init_std * jax.random.normal(
            kw, (dims[i], dims[i + 1]), dtype=jnp.float32))
        biases.append(0.1 * jax.random.normal(
            kb, (dims[i + 1],), dtype=jnp.float32))

    out = dnn_v2_forward(x, weights, biases, block_rows=128, use_bf16=False)
    out = jax.block_until_ready(out)

    ref = _reference(x, weights, biases)
    assert out.shape == (B, hidden_units[-1])
    assert jnp.allclose(out, ref, atol=1e-4, rtol=1e-4), "mismatch vs reference"
    print("KERNEL_OK")
</pallas_src>

<mosaic_0001>
module attributes {stable_mosaic.version = 11 : i64} {
  func.func @_dnn_kernel(%arg0: i32, %arg1: memref<128x32xf32, #tpu.memory_space<vmem>>, %arg2: memref<32x128xf32, #tpu.memory_space<vmem>>, %arg3: memref<1x128xf32, #tpu.memory_space<vmem>>, %arg4: memref<128x128xf32, #tpu.memory_space<vmem>>, %arg5: memref<1x128xf32, #tpu.memory_space<vmem>>, %arg6: memref<128x128xf32, #tpu.memory_space<vmem>>) attributes {dimension_semantics = [#tpu.dimension_semantics<parallel>], iteration_bounds = array<i64: 2>, scalar_prefetch = 0 : i64, scratch_operands = 0 : i64, tpu.core_type = #tpu.core_type<tc>, window_params = [{transform_indices = @transform_0, window_bounds = array<i64: 128, 32>}, {pipeline_mode = #tpu.pipeline_mode<synchronous>, transform_indices = @transform_1, window_bounds = array<i64: 32, 128>}, {pipeline_mode = #tpu.pipeline_mode<synchronous>, transform_indices = @transform_2, window_bounds = array<i64: 1, 128>}, {pipeline_mode = #tpu.pipeline_mode<synchronous>, transform_indices = @transform_3, window_bounds = array<i64: 128, 128>}, {pipeline_mode = #tpu.pipeline_mode<synchronous>, transform_indices = @transform_4, window_bounds = array<i64: 1, 128>}, {transform_indices = @transform_5, window_bounds = array<i64: 128, 128>}]} {
    %c0 = arith.constant 0 : index
    %c0_0 = arith.constant 0 : index
    %0 = vector.load %arg1[%c0, %c0_0] : memref<128x32xf32, #tpu.memory_space<vmem>>, vector<128x32xf32>
    %c0_1 = arith.constant 0 : index
    %c0_2 = arith.constant 0 : index
    %1 = vector.load %arg2[%c0_1, %c0_2] : memref<32x128xf32, #tpu.memory_space<vmem>>, vector<32x128xf32>
    %c0_3 = arith.constant 0 : index
    %c0_4 = arith.constant 0 : index
    %2 = vector.load %arg3[%c0_3, %c0_4] : memref<1x128xf32, #tpu.memory_space<vmem>>, vector<1x128xf32>
    %cst = arith.constant dense<0.000000e+00> : vector<128x128xf32>
    %3 = tpu.matmul %0, %1, %cst {dimension_numbers = #tpu.dot_dimension_numbers<[1], [0], [0], [1], [0, 0, 1, 1], [], []>} : vector<128x32xf32>, vector<32x128xf32>, vector<128x128xf32> -> vector<128x128xf32>
    %4 = vector.broadcast %2 : vector<1x128xf32> to vector<128x128xf32>
    %5 = arith.addf %3, %4 : vector<128x128xf32>
    %cst_5 = arith.constant 0.000000e+00 : f32
    %6 = vector.broadcast %cst_5 : f32 to vector<128x128xf32>
    %7 = arith.maximumf %5, %6 : vector<128x128xf32>
    %c0_6 = arith.constant 0 : index
    %c0_7 = arith.constant 0 : index
    %8 = vector.load %arg4[%c0_6, %c0_7] : memref<128x128xf32, #tpu.memory_space<vmem>>, vector<128x128xf32>
    %c0_8 = arith.constant 0 : index
    %c0_9 = arith.constant 0 : index
    %9 = vector.load %arg5[%c0_8, %c0_9] : memref<1x128xf32, #tpu.memory_space<vmem>>, vector<1x128xf32>
    %cst_10 = arith.constant dense<0.000000e+00> : vector<128x128xf32>
    %10 = tpu.matmul %7, %8, %cst_10 {dimension_numbers = #tpu.dot_dimension_numbers<[1], [0], [0], [1], [0, 0, 1, 1], [], []>} : vector<128x128xf32>, vector<128x128xf32>, vector<128x128xf32> -> vector<128x128xf32>
    %11 = vector.broadcast %9 : vector<1x128xf32> to vector<128x128xf32>
    %12 = arith.addf %10, %11 : vector<128x128xf32>
    %c0_11 = arith.constant 0 : index
    %c0_12 = arith.constant 0 : index
    %13 = vector.load %arg6[%c0_11, %c0_12] : memref<128x128xf32, #tpu.memory_space<vmem>>, vector<128x128xf32>
    tpu.vector_store %arg6[%c0_11, %c0_12], %12 {strides = array<i32>} : memref<128x128xf32, #tpu.memory_space<vmem>>, vector<128x128xf32>,
    return
  }
  func.func @transform_0(%arg0: i32) -> (i32, i32) {
    %c0_i32 = arith.constant 0 : i32
    %c0_i32_0 = arith.constant 0 : i32
    return %arg0, %c0_i32 : i32, i32
  }
  func.func @transform_1(%arg0: i32) -> (i32, i32) {
    %c0_i32 = arith.constant 0 : i32
    %c0_i32_0 = arith.constant 0 : i32
    %c0_i32_1 = arith.constant 0 : i32
    return %c0_i32, %c0_i32_0 : i32, i32
  }
  func.func @transform_2(%arg0: i32) -> (i32, i32) {
    %c0_i32 = arith.constant 0 : i32
    %c0_i32_0 = arith.constant 0 : i32
    %c0_i32_1 = arith.constant 0 : i32
    return %c0_i32, %c0_i32_0 : i32, i32
  }
  func.func @transform_3(%arg0: i32) -> (i32, i32) {
    %c0_i32 = arith.constant 0 : i32
    %c0_i32_0 = arith.constant 0 : i32
    %c0_i32_1 = arith.constant 0 : i32
    return %c0_i32, %c0_i32_0 : i32, i32
  }
  func.func @transform_4(%arg0: i32) -> (i32, i32) {
    %c0_i32 = arith.constant 0 : i32
    %c0_i32_0 = arith.constant 0 : i32
    %c0_i32_1 = arith.constant 0 : i32
    return %c0_i32, %c0_i32_0 : i32, i32
  }
  func.func @transform_5(%arg0: i32) -> (i32, i32) {
    %c0_i32 = arith.constant 0 : i32
    %c0_i32_0 = arith.constant 0 : i32
    return %arg0, %c0_i32 : i32, i32
  }
}

</mosaic_0001>

<llo_original>
// kernel: tpu_custom_call.1
$region0: #{tpu_custom_call.1}
  #allocation0 [shape = 'u32[]', space=smem, size = 0x4, offset = 0x4, fixed_abs, tag = 'smem constant byte address 0x4 - core index']
  #allocation1 [shape = 'u32[72,128]{1,0:T(1,128)}', space=vmem, size = 0x9000, scoped, tag = 'internal scratch']
  %s0 = inlined_call_operand.vmem [shape: f32[256,32], index: 0, kind: input, shape index: {}]
  %s1 = inlined_call_operand.vmem [shape: f32[32,128], index: 1, kind: input, shape index: {}]
  %s2 = inlined_call_operand.vmem [shape: f32[1,128], index: 2, kind: input, shape index: {}]
  %s3 = inlined_call_operand.vmem [shape: f32[128,128], index: 3, kind: input, shape index: {}]
  %s4 = inlined_call_operand.vmem [shape: f32[1,128], index: 4, kind: input, shape index: {}]
  %s5 = inlined_call_operand.hbm [shape: f32[256,128], index: 5, kind: output, shape index: {}]
  %s6 = sld [smem:[#allocation0]]
  $region53: #{tpu_custom_call.1} parent=0
    _
  %s8 = ssub.s32 1, %s6
  %s9 = scalar_select 0, %s8, %s6
  $region1: #{tpu_custom_call.1} parent=0
    #allocation2 [shape = 'u8[131072]{0}', space=vmem, size = 0x20000, scoped, tag = 'output window, operand 0']
    #allocation3 [shape = 's32[2]{0}', space=sflag, size = 0x8, scoped, tag = 'scoped memory for tpu_custom_call.1']
    %10 = vsyncpa [#allocation3], 0
    %s11 = scalar_lea.sflag [#allocation3], 1
    %12 = vsyncpa %s11, 0
    loop: start=0, step=1, limit=4
    $region2: #{tpu_custom_call.1} parent=1 // loop_pre_header
      _
    $region3: #{tpu_custom_call.1} parent=1 // loop_header
      %s14 = sphi 0, %s18
      %p15 = scmp.ge.s32.totalorder %s14, 4
      %s24 = sphi 0, %s26
      %s27 = sphi 0, %s24
      %s28 = sphi 0, %s27
      %s44 = sphi 0, %s28
      %s48 = sphi 0, %s48
      %s50 = sphi 0, %s48
      %s51 = sphi 0, %s50
      %s65 = sphi 0, %s51
      %s69 = sphi 0, %s69
      %s71 = sphi 0, %s69
      %s72 = sphi 0, %s71
      %s86 = sphi 0, %s72
      %s90 = sphi 0, %s90
      %s92 = sphi 0, %s90
      %s93 = sphi 0, %s92
      %s107 = sphi 0, %s93
      %s111 = sphi 0, %s111
      %s113 = sphi 0, %s111
      %s114 = sphi 0, %s113
      %s128 = sphi 0, %s114
      %s134 = sphi 0, %s136
      %s137 = sphi 0, %s134
      %s138 = sphi 0, %s137
      %s154 = sphi 0, %s138
    $region4: #{tpu_custom_call.1} parent=1 // loop_header_branch
      %17 = sbr.rel (%p15) target = $region8
    $region5: #{tpu_custom_call.1} parent=1 // loop_body
      %s19 = ssub.s32 %s14, 1
      %s20 = ssub.s32 %s14, 2
      %s21 = sadd.s32 %s14, 1
      %s22 = ssub.s32 %s14, %s21
      %p23 = scmp.eq.s32.totalorder %s22, 0
      %s25 = sadd.s32 %s24, 1
      %s26 = scalar_select %p23, %s24, %s25
      %p29 = pneg %p23
      %p30 = scmp.eq.s32.totalorder %s14, 1
      %p31 = por %p29, %p30
      %p32 = scmp.ne.s32.totalorder %s24, %s27
      %p33 = scmp.eq.s32.totalorder %s14, 0
      %p34 = por %p32, %p33
      %p35 = scmp.ne.s32.totalorder %s24, %s27
      %p36 = scmp.eq.s32.totalorder %s19, 1
      %p37 = por %p35, %p36
      %p38 = scmp.ne.s32.totalorder %s27, %s28
      %p39 = scmp.eq.s32.totalorder %s19, 0
      %p40 = por %p38, %p39
      %p41 = scmp.ne.s32.totalorder %s27, %s28
      %p42 = scmp.eq.s32.totalorder %s20, 1
      %p43 = por %p41, %p42
      %p45 = scmp.ne.s32.totalorder %s28, %s44
      %p46 = scmp.eq.s32.totalorder %s20, 0
      %p47 = por %p45, %p46
      %s49 = sadd.s32 %s48, 1
      %p52 = scmp.eq.s32.totalorder %s14, 1
      %p53 = scmp.ne.s32.totalorder %s48, %s50
      %p54 = scmp.eq.s32.totalorder %s14, 0
      %p55 = por %p53, %p54
      %p56 = scmp.ne.s32.totalorder %s48, %s50
      %p57 = scmp.eq.s32.totalorder %s19, 1
      %p58 = por %p56, %p57
      %p59 = scmp.ne.s32.totalorder %s50, %s51
      %p60 = scmp.eq.s32.totalorder %s19, 0
      %p61 = por %p59, %p60
      %p62 = scmp.ne.s32.totalorder %s50, %s51
      %p63 = scmp.eq.s32.totalorder %s20, 1
      %p64 = por %p62, %p63
      %p66 = scmp.ne.s32.totalorder %s51, %s65
      %p67 = scmp.eq.s32.totalorder %s20, 0
      %p68 = por %p66, %p67
      %s70 = sadd.s32 %s69, 1
      %p73 = scmp.eq.s32.totalorder %s14, 1
      %p74 = scmp.ne.s32.totalorder %s69, %s71
      %p75 = scmp.eq.s32.totalorder %s14, 0
      %p76 = por %p74, %p75
      %p77 = scmp.ne.s32.totalorder %s69, %s71
      %p78 = scmp.eq.s32.totalorder %s19, 1
      %p79 = por %p77, %p78
      %p80 = scmp.ne.s32.totalorder %s71, %s72
      %p81 = scmp.eq.s32.totalorder %s19, 0
      %p82 = por %p80, %p81
      %p83 = scmp.ne.s32.totalorder %s71, %s72
      %p84 = scmp.eq.s32.totalorder %s20, 1
      %p85 = por %p83, %p84
      %p87 = scmp.ne.s32.totalorder %s72, %s86
      %p88 = scmp.eq.s32.totalorder %s20, 0
      %p89 = por %p87, %p88
      %s91 = sadd.s32 %s90, 1
      %p94 = scmp.eq.s32.totalorder %s14, 1
      %p95 = scmp.ne.s32.totalorder %s90, %s92
      %p96 = scmp.eq.s32.totalorder %s14, 0
      %p97 = por %p95, %p96
      %p98 = scmp.ne.s32.totalorder %s90, %s92
      %p99 = scmp.eq.s32.totalorder %s19, 1
      %p100 = por %p98, %p99
      %p101 = scmp.ne.s32.totalorder %s92, %s93
      %p102 = scmp.eq.s32.totalorder %s19, 0
      %p103 = por %p101, %p102
      %p104 = scmp.ne.s32.totalorder %s92, %s93
      %p105 = scmp.eq.s32.totalorder %s20, 1
      %p106 = por %p104, %p105
      %p108 = scmp.ne.s32.totalorder %s93, %s107
      %p109 = scmp.eq.s32.totalorder %s20, 0
      %p110 = por %p108, %p109
      %s112 = sadd.s32 %s111, 1
      %p115 = scmp.eq.s32.totalorder %s14, 1
      %p116 = scmp.ne.s32.totalorder %s111, %s113
      %p117 = scmp.eq.s32.totalorder %s14, 0
      %p118 = por %p116, %p117
      %p119 = scmp.ne.s32.totalorder %s111, %s113
      %p120 = scmp.eq.s32.totalorder %s19, 1
      %p121 = por %p119, %p120
      %p122 = scmp.ne.s32.totalorder %s113, %s114
      %p123 = scmp.eq.s32.totalorder %s19, 0
      %p124 = por %p122, %p123
      %p125 = scmp.ne.s32.totalorder %s113, %s114
      %p126 = scmp.eq.s32.totalorder %s20, 1
      %p127 = por %p125, %p126
      %p129 = scmp.ne.s32.totalorder %s114, %s128
      %p130 = scmp.eq.s32.totalorder %s20, 0
      %p131 = por %p129, %p130
      %s132 = ssub.s32 %s14, %s21
      %p133 = scmp.eq.s32.totalorder %s132, 0
      %s135 = sadd.s32 %s134, 1
      %s136 = scalar_select %p133, %s134, %s135
      %p139 = pneg %p133
      %p140 = scmp.eq.s32.totalorder %s14, 1
      %p141 = por %p139, %p140
      %p142 = scmp.ne.s32.totalorder %s134, %s137
      %p143 = scmp.eq.s32.totalorder %s14, 0
      %p144 = por %p142, %p143
      %p145 = scmp.ne.s32.totalorder %s134, %s137
      %p146 = scmp.eq.s32.totalorder %s19, 1
      %p147 = por %p145, %p146
      %p148 = scmp.ne.s32.totalorder %s137, %s138
      %p149 = scmp.eq.s32.totalorder %s19, 0
      %p150 = por %p148, %p149
      %p151 = scmp.ne.s32.totalorder %s137, %s138
      %p152 = scmp.eq.s32.totalorder %s20, 1
      %p153 = por %p151, %p152
      %p155 = scmp.ne.s32.totalorder %s138, %s154
      %p156 = scmp.eq.s32.totalorder %s20, 0
      %p157 = por %p155, %p156
      %p158 = scmp.le.s32.totalorder 1, %s14
      %p159 = scmp.lt.s32.totalorder %s14, 3
      %p160 = pnand %p158, %p159
      %p161 = pneg %p160
      // Predicated region
      $region9: #{tpu_custom_call.1} parent=5 // pred_check
        _
      $region10: #{tpu_custom_call.1} parent=5 // pred_check_branch
        %163 = sbr.rel (%p160) target = $region12
      $region11: #{tpu_custom_call.1} parent=5 // pred_region
        %s164 = ssub.s32 %s14, 1
        // Predicated region
        $region13: #{tpu_custom_call.1} parent=11 // pred_check
          %p165 = pneg %p61
        $region14: #{tpu_custom_call.1} parent=11 // pred_check_branch
          %167 = sbr.rel (%p165) target = $region16
        $region15: #{tpu_custom_call.1} parent=11 // pred_region
          _
        $region16: #{tpu_custom_call.1} parent=11 // pred_fallthru
          _
        // Predicated region
        $region17: #{tpu_custom_call.1} parent=11 // pred_check
          %p168 = pneg %p82
        $region18: #{tpu_custom_call.1} parent=11 // pred_check_branch
          %170 = sbr.rel (%p168) target = $region20
        $region19: #{tpu_custom_call.1} parent=11 // pred_region
          _
        $region20: #{tpu_custom_call.1} parent=11 // pred_fallthru
          _
        // Predicated region
        $region21: #{tpu_custom_call.1} parent=11 // pred_check
          %p171 = pneg %p103
        $region22: #{tpu_custom_call.1} parent=11 // pred_check_branch
          %173 = sbr.rel (%p171) target = $region24
        $region23: #{tpu_custom_call.1} parent=11 // pred_region
          _
        $region24: #{tpu_custom_call.1} parent=11 // pred_fallthru
          _
        // Predicated region
        $region25: #{tpu_custom_call.1} parent=11 // pred_check
          %p174 = pneg %p124
        $region26: #{tpu_custom_call.1} parent=11 // pred_check_branch
          %176 = sbr.rel (%p174) target = $region28
        $region27: #{tpu_custom_call.1} parent=11 // pred_region
          _
        $region28: #{tpu_custom_call.1} parent=11 // pred_fallthru
          _
      $region12: #{tpu_custom_call.1} parent=5 // pred_fallthru
        _
      %p177 = scmp.lt.s32.totalorder %s14, 2
      // Predicated region
      $region29: #{tpu_custom_call.1} parent=5 // pred_check
        %p178 = pneg %p177
      $region30: #{tpu_custom_call.1} parent=5 // pred_check_branch
        %180 = sbr.rel (%p178) target = $region32
      $region31: #{tpu_custom_call.1} parent=5 // pred_region
        // Predicated region
        $region33: #{tpu_custom_call.1} parent=31 // pred_check
          %p181 = pneg %p34
        $region34: #{tpu_custom_call.1} parent=31 // pred_check_branch
          %183 = sbr.rel (%p181) target = $region36
        $region35: #{tpu_custom_call.1} parent=31 // pred_region
          %s184 = smul.u32 16, %s14
          %p185 = scmp.lt.s32.totalorder %s184, 31
          %s186 = scalar_select %p185, %s184, 31
          %s187 = smul.addr %s186, 8
          %s188 = scalar_lea.vmem %s0, %s187
          %s189 = smul.u32 16, %s14
        $region36: #{tpu_custom_call.1} parent=31 // pred_fallthru
          _
      $region32: #{tpu_custom_call.1} parent=5 // pred_fallthru
        _
      %p190 = scmp.le.s32.totalorder 1, %s14
      %p191 = scmp.lt.s32.totalorder %s14, 3
      %p192 = pnand %p190, %p191
      %p193 = pneg %p192
      // Predicated region
      $region37: #{tpu_custom_call.1} parent=5 // pred_check
        _
      $region38: #{tpu_custom_call.1} parent=5 // pred_check_branch
        %195 = sbr.rel (%p192) target = $region40
      $region39: #{tpu_custom_call.1} parent=5 // pred_region
        %s196 = ssub.s32 %s14, 1
        %s197 = smul.u32 16, %s19
        %p198 = scmp.lt.s32.totalorder %s197, 31
        %s199 = scalar_select %p198, %s197, 31
        %s200 = smul.addr %s199, 8
        %s201 = scalar_lea.vmem %s0, %s200
        %p202 = pneg %p40
        %p203 = pneg %p37
        %p204 = pneg %p61
        %p205 = pneg %p58
        %p206 = pneg %p82
        %p207 = pneg %p79
        %p208 = pneg %p103
        %p209 = pneg %p100
        %p210 = pneg %p124
        %p211 = pneg %p121
        %p212 = pneg %p150
        %p213 = pneg %p147
        %s214 = sand.u32 %s137, 1
        %s215 = scalar_lea.sflag [#allocation3], %s214
        %s216 = sand.u32 %s137, 1
        %s217 = smul.addr %s216, 128
        %s218 = scalar_lea.vmem [#allocation2], %s217
        %s219 = smul.u32 16, %s19
        %p220 = scmp.lt.s32.totalorder %s219, 31
        %s221 = scalar_select %p220, %s219, 31
        %s222 = smul.addr %s221, 8
        %s223 = scalar_lea.vmem %s0, %s222
        %s224 = smul.u32 16, %s19
        %s225 = smul.u32 16, %s19
        %v226 = vld [vmem:[%s223] sm:$0xff]
        %v227 = vld [vmem:[%s223 + $0x8] sm:$0xff]
        %v228 = vld [vmem:[%s223 + $0x10] sm:$0xff]
        %v229 = vld [vmem:[%s223 + $0x18] sm:$0xff]
        %v230 = vld [vmem:[%s223 + $0x20] sm:$0xff]
        %v231 = vld [vmem:[%s223 + $0x28] sm:$0xff]
        %v232 = vld [vmem:[%s223 + $0x30] sm:$0xff]
        %v233 = vld [vmem:[%s223 + $0x38] sm:$0xff]
        %v234 = vld [vmem:[%s223 + $0x40] sm:$0xff]
        %v235 = vld [vmem:[%s223 + $0x48] sm:$0xff]
        %v236 = vld [vmem:[%s223 + $0x50] sm:$0xff]
        %v237 = vld [vmem:[%s223 + $0x58] sm:$0xff]
        %v238 = vld [vmem:[%s223 + $0x60] sm:$0xff]
        %v239 = vld [vmem:[%s223 + $0x68] sm:$0xff]
        %v240 = vld [vmem:[%s223 + $0x70] sm:$0xff]
        %v241 = vld [vmem:[%s223 + $0x78] sm:$0xff]
        %v242 = vld [vmem:[%s1] sm:$0xff]
        %v243 = vld [vmem:[%s1 + $0x8] sm:$0xff]
        %v244 = vld [vmem:[%s1 + $0x10] sm:$0xff]
        %v245 = vld [vmem:[%s1 + $0x18] sm:$0xff]
        %v246 = vld [vmem:[%s2] sm:$0x1]
        %v248 = vperm.slane %v246, 0
        %vm250 = vcmask 261120
        %v252 = vsel %vm250, %v226, 0
        %v255 = vsel %vm250, %v227, 0
        %v258 = vsel %vm250, %v228, 0
        %v261 = vsel %vm250, %v229, 0
        %v264 = vsel %vm250, %v230, 0
        %v267 = vsel %vm250, %v231, 0
        %v270 = vsel %vm250, %v232, 0
        %v273 = vsel %vm250, %v233, 0
        %v276 = vsel %vm250, %v234, 0
        %v279 = vsel %vm250, %v235, 0
        %v282 = vsel %vm250, %v236, 0
        %v285 = vsel %vm250, %v237, 0
        %v288 = vsel %vm250, %v238, 0
        %v291 = vsel %vm250, %v239, 0
        %v294 = vsel %vm250, %v240, 0
        %v297 = vsel %vm250, %v241, 0
        %299 = vmatpush.msra.mxu0 0.0
        %300 = vmatpush.msra.mxu0 0.0
        %301 = vmatpush.msra.mxu0 0.0
        %302 = vmatpush.msra.mxu0 0.0
        %303 = vmatpush.msra.mxu0 0.0
        %304 = vmatpush.msra.mxu0 0.0
        %305 = vmatpush.msra.mxu0 0.0
        %306 = vmatpush.msra.mxu0 0.0
        %307 = vmatpush.msra.mxu0 0.0
        %308 = vmatpush.msra.mxu0 0.0
        %309 = vmatpush.msra.mxu0 0.0
        %310 = vmatpush.msra.mxu0 0.0
        %311 = vmatpush.msra.mxu0 %v245
        %312 = vmatpush.msra.mxu0 %v244
        %313 = vmatpush.msra.mxu0 %v243
        %314 = vmatpush.msra.mxu0 %v242
        %315 = vmatmul.f32.gmra.mxu0 %v252
        %v316 = vpop.f32.mrf.mxu0
        %v317 = vadd.f32 %v248, %v316
        %318 = vmatmul.f32.gmra.mxu0 %v255
        %v319 = vpop.f32.mrf.mxu0
        %v320 = vadd.f32 %v248, %v319
        %321 = vmatmul.f32.gmra.mxu0 %v258
        %v322 = vpop.f32.mrf.mxu0
        %v323 = vadd.f32 %v248, %v322
        %324 = vmatmul.f32.gmra.mxu0 %v261
        %v325 = vpop.f32.mrf.mxu0
        %v326 = vadd.f32 %v248, %v325
        %327 = vmatmul.f32.gmra.mxu0 %v264
        %v328 = vpop.f32.mrf.mxu0
        %v329 = vadd.f32 %v248, %v328
        %330 = vmatmul.f32.gmra.mxu0 %v267
        %v331 = vpop.f32.mrf.mxu0
        %v332 = vadd.f32 %v248, %v331
        %333 = vmatmul.f32.gmra.mxu0 %v270
        %v334 = vpop.f32.mrf.mxu0
        %v335 = vadd.f32 %v248, %v334
        %336 = vmatmul.f32.gmra.mxu0 %v273
        %v337 = vpop.f32.mrf.mxu0
        %v338 = vadd.f32 %v248, %v337
        %339 = vmatmul.f32.gmra.mxu0 %v276
        %v340 = vpop.f32.mrf.mxu0
        %v341 = vadd.f32 %v248, %v340
        %342 = vmatmul.f32.gmra.mxu0 %v279
        %v343 = vpop.f32.mrf.mxu0
        %v344 = vadd.f32 %v248, %v343
        %345 = vmatmul.f32.gmra.mxu0 %v282
        %v346 = vpop.f32.mrf.mxu0
        %v347 = vadd.f32 %v248, %v346
        %348 = vmatmul.f32.gmra.mxu0 %v285
        %v349 = vpop.f32.mrf.mxu0
        %v350 = vadd.f32 %v248, %v349
        %351 = vmatmul.f32.gmra.mxu0 %v288
        %v352 = vpop.f32.mrf.mxu0
        %v353 = vadd.f32 %v248, %v352
        %354 = vmatmul.f32.gmra.mxu0 %v291
        %v355 = vpop.f32.mrf.mxu0
        %v356 = vadd.f32 %v248, %v355
        %357 = vmatmul.f32.gmra.mxu0 %v294
        %v358 = vpop.f32.mrf.mxu0
        %v359 = vadd.f32 %v248, %v358
        %360 = vmatmul.f32.gmra.mxu0 %v297
        %v361 = vpop.f32.mrf.mxu0
        %v362 = vadd.f32 %v248, %v361
        %363 = vdwg.mxu0
        %v364 = vmax.f32 %v317, 0.0
        %v365 = vmax.f32 %v320, 0.0
        %v366 = vmax.f32 %v323, 0.0
        %v367 = vmax.f32 %v326, 0.0
        %v368 = vmax.f32 %v329, 0.0
        %v369 = vmax.f32 %v332, 0.0
        %v370 = vmax.f32 %v335, 0.0
        %v371 = vmax.f32 %v338, 0.0
        %v372 = vmax.f32 %v341, 0.0
        %v373 = vmax.f32 %v344, 0.0
        %v374 = vmax.f32 %v347, 0.0
        %v375 = vmax.f32 %v350, 0.0
        %v376 = vmax.f32 %v353, 0.0
        %v377 = vmax.f32 %v356, 0.0
        %v378 = vmax.f32 %v359, 0.0
        %v379 = vmax.f32 %v362, 0.0
        %v380 = vld [vmem:[%s3] sm:$0xff]
        %v381 = vld [vmem:[%s3 + $0x8] sm:$0xff]
        %v382 = vld [vmem:[%s3 + $0x10] sm:$0xff]
        %v383 = vld [vmem:[%s3 + $0x18] sm:$0xff]
        %v384 = vld [vmem:[%s3 + $0x20] sm:$0xff]
        %v385 = vld [vmem:[%s3 + $0x28] sm:$0xff]
        %v386 = vld [vmem:[%s3 + $0x30] sm:$0xff]
        %v387 = vld [vmem:[%s3 + $0x38] sm:$0xff]
        %v388 = vld [vmem:[%s3 + $0x40] sm:$0xff]
        %v389 = vld [vmem:[%s3 + $0x48] sm:$0xff]
        %v390 = vld [vmem:[%s3 + $0x50] sm:$0xff]
        %v391 = vld [vmem:[%s3 + $0x58] sm:$0xff]
        %v392 = vld [vmem:[%s3 + $0x60] sm:$0xff]
        %v393 = vld [vmem:[%s3 + $0x68] sm:$0xff]
        %v394 = vld [vmem:[%s3 + $0x70] sm:$0xff]
        %v395 = vld [vmem:[%s3 + $0x78] sm:$0xff]
        %v396 = vld [vmem:[%s4] sm:$0x1]
        %v398 = vperm.slane %v396, 0
        %400 = vmatpush.msra.mxu0 %v395
        %401 = vmatpush.msra.mxu0 %v394
        %402 = vmatpush.msra.mxu0 %v393
        %403 = vmatpush.msra.mxu0 %v392
        %404 = vmatpush.msra.mxu0 %v391
        %405 = vmatpush.msra.mxu0 %v390
        %406 = vmatpush.msra.mxu0 %v389
        %407 = vmatpush.msra.mxu0 %v388
        %408 = vmatpush.msra.mxu0 %v387
        %409 = vmatpush.msra.mxu0 %v386
        %410 = vmatpush.msra.mxu0 %v385
        %411 = vmatpush.msra.mxu0 %v384
        %412 = vmatpush.msra.mxu0 %v383
        %413 = vmatpush.msra.mxu0 %v382
        %414 = vmatpush.msra.mxu0 %v381
        %415 = vmatpush.msra.mxu0 %v380
        %416 = vmatmul.f32.gmra.mxu0 %v364
        %v417 = vpop.f32.mrf.mxu0
        %v418 = vadd.f32 %v398, %v417
        %419 = vmatmul.f32.gmra.mxu0 %v365
        %v420 = vpop.f32.mrf.mxu0
        %v421 = vadd.f32 %v398, %v420
        %422 = vmatmul.f32.gmra.mxu0 %v366
        %v423 = vpop.f32.mrf.mxu0
        %v424 = vadd.f32 %v398, %v423
        %425 = vmatmul.f32.gmra.mxu0 %v367
        %v426 = vpop.f32.mrf.mxu0
        %v427 = vadd.f32 %v398, %v426
        %428 = vmatmul.f32.gmra.mxu0 %v368
        %v429 = vpop.f32.mrf.mxu0
        %v430 = vadd.f32 %v398, %v429
        %431 = vmatmul.f32.gmra.mxu0 %v369
        %v432 = vpop.f32.mrf.mxu0
        %v433 = vadd.f32 %v398, %v432
        %434 = vmatmul.f32.gmra.mxu0 %v370
        %v435 = vpop.f32.mrf.mxu0
        %v436 = vadd.f32 %v398, %v435
        %437 = vmatmul.f32.gmra.mxu0 %v371
        %v438 = vpop.f32.mrf.mxu0
        %v439 = vadd.f32 %v398, %v438
        %440 = vmatmul.f32.gmra.mxu0 %v372
        %v441 = vpop.f32.mrf.mxu0
        %v442 = vadd.f32 %v398, %v441
        %443 = vmatmul.f32.gmra.mxu0 %v373
        %v444 = vpop.f32.mrf.mxu0
        %v445 = vadd.f32 %v398, %v444
        %446 = vmatmul.f32.gmra.mxu0 %v374
        %v447 = vpop.f32.mrf.mxu0
        %v448 = vadd.f32 %v398, %v447
        %449 = vmatmul.f32.gmra.mxu0 %v375
        %v450 = vpop.f32.mrf.mxu0
        %v451 = vadd.f32 %v398, %v450
        %452 = vmatmul.f32.gmra.mxu0 %v376
        %v453 = vpop.f32.mrf.mxu0
        %v454 = vadd.f32 %v398, %v453
        %455 = vmatmul.f32.gmra.mxu0 %v377
        %v456 = vpop.f32.mrf.mxu0
        %v457 = vadd.f32 %v398, %v456
        %458 = vmatmul.f32.gmra.mxu0 %v378
        %v459 = vpop.f32.mrf.mxu0
        %v460 = vadd.f32 %v398, %v459
        %461 = vmatmul.f32.gmra.mxu0 %v379
        %v462 = vpop.f32.mrf.mxu0
        %v463 = vadd.f32 %v398, %v462
        %464 = vdwg.mxu0
        %465 = vst [vmem:[%s218] sm:$0xff] %v418
        %466 = vst [vmem:[%s218 + $0x8] sm:$0xff] %v421
        %467 = vst [vmem:[%s218 + $0x10] sm:$0xff] %v424
        %468 = vst [vmem:[%s218 + $0x18] sm:$0xff] %v427
        %469 = vst [vmem:[%s218 + $0x20] sm:$0xff] %v430
        %470 = vst [vmem:[%s218 + $0x28] sm:$0xff] %v433
        %471 = vst [vmem:[%s218 + $0x30] sm:$0xff] %v436
        %472 = vst [vmem:[%s218 + $0x38] sm:$0xff] %v439
        %473 = vst [vmem:[%s218 + $0x40] sm:$0xff] %v442
        %474 = vst [vmem:[%s218 + $0x48] sm:$0xff] %v445
        %475 = vst [vmem:[%s218 + $0x50] sm:$0xff] %v448
        %476 = vst [vmem:[%s218 + $0x58] sm:$0xff] %v451
        %477 = vst [vmem:[%s218 + $0x60] sm:$0xff] %v454
        %478 = vst [vmem:[%s218 + $0x68] sm:$0xff] %v457
        %479 = vst [vmem:[%s218 + $0x70] sm:$0xff] %v460
        %480 = vst [vmem:[%s218 + $0x78] sm:$0xff] %v463
        %s481 = sand.u32 %s137, 1
        %s482 = scalar_lea.sflag [#allocation3], %s481
        %s483 = sand.u32 %s137, 1
        %s484 = smul.addr %s483, 128
        %s485 = scalar_lea.vmem [#allocation2], %s484
        // Predicated region
        $region41: #{tpu_custom_call.1} parent=39 // pred_check
          %p486 = pneg %p147
        $region42: #{tpu_custom_call.1} parent=39 // pred_check_branch
          %488 = sbr.rel (%p486) target = $region44
        $region43: #{tpu_custom_call.1} parent=39 // pred_region
          %s489 = smul.u32 16, %s19
          %491 = vsyncadd %s482, 0
          %s492 = smul.addr %s489, 8
          %s493 = scalar_lea.hbm %s5, %s492
          %s494 = sshll.u32 %s485, 4
          %s495 = int_to_ptr.vmem [resolvable:$true] %s494
          %s496 = sshll.u32 %s493, 4
          %s497 = int_to_ptr.hbm [resolvable:$true] %s496
          %502 = dma.vmem_to_hbm [thread:$0]  %s495, 2048, %s497, %s482, 128, 128, 8
        $region44: #{tpu_custom_call.1} parent=39 // pred_fallthru
          _
      $region40: #{tpu_custom_call.1} parent=5 // pred_fallthru
        _
      %p503 = scmp.le.s32.totalorder 2, %s14
      // Predicated region
      $region45: #{tpu_custom_call.1} parent=5 // pred_check
        %p504 = pneg %p503
      $region46: #{tpu_custom_call.1} parent=5 // pred_check_branch
        %506 = sbr.rel (%p504) target = $region48
      $region47: #{tpu_custom_call.1} parent=5 // pred_region
        %s507 = ssub.s32 %s14, 2
        // Predicated region
        $region49: #{tpu_custom_call.1} parent=47 // pred_check
          %p508 = pneg %p153
        $region50: #{tpu_custom_call.1} parent=47 // pred_check_branch
          %510 = sbr.rel (%p508) target = $region52
        $region51: #{tpu_custom_call.1} parent=47 // pred_region
          %s511 = sand.u32 %s138, 1
          %s512 = scalar_lea.sflag [#allocation3], %s511
          %s513 = sand.u32 %s138, 1
          %s514 = smul.addr %s513, 128
          %s515 = scalar_lea.vmem [#allocation2], %s514
          %517 = dma.done %s512, 2048
        $region52: #{tpu_custom_call.1} parent=47 // pred_fallthru
          _
      $region48: #{tpu_custom_call.1} parent=5 // pred_fallthru
        _
    $region6: #{tpu_custom_call.1} parent=1 // loop_footer
      %s18 = sadd.s32 1, %s14
    $region7: #{tpu_custom_call.1} parent=1 // loop_footer_branch
      %13 = sbr.rel target = $region3
    $region8: #{tpu_custom_call.1} parent=1 // loop_exit
      _
    %518 = vsyncpa [#allocation3], 1
    %s519 = scalar_lea.sflag [#allocation3], 1
    %520 = vsyncpa %s519, 1

</llo_original>
